<compile_context>
chip_gen: v5e
topology: v5e:2x2
jax: 0.10.0
libtpu: 0.0.40
codegen_flags: <defaults>
</compile_context>

<pallas_src>
import functools

import jax
import jax.numpy as jnp
from jax.experimental import pallas as pl
from jax.experimental.pallas import tpu as pltpu


def dueling_dqn_kernel(x_ref, hdr_ref, w_ref, w2_ref, out_ref, *,
                       padded_state_dim, hidden, action_dim):
    """One batch tile; all parameters VMEM-resident (constant index_map).

    Inputs:
      x_ref   (Bt, S_pad)        f32   state features (zero-padded cols >= S)
      hdr_ref (8, 2H)            f32   row0=bs | row1=[bv1|ba1] | row2=ba2(pad)
                                       row3=wv2 row | row4 lane0 = bv2
      w_ref   (S_pad + H, H)     bf16/f32  rows [0,S_pad)=W1, [S_pad,S_pad+H)=
                                       advantage head (cols [0,A)=Wa2, rest 0)
      w2_ref  (H, 2H)            bf16/f32  fused hidden layer [Wv1 | Wa1]
    Output:
      out_ref (Bt, H)            f32   cols [0, A) hold Q(s,a); cols >= A are
                                       don't-care (wrapper slices them off).
    """
    S, H, A = padded_state_dim, hidden, action_dim
    f32 = jnp.float32

    # f32 header: one aligned (8, 2H) load, cheap in-vreg row/lane slices.
    hdr = hdr_ref[...]                              # (8, 2H) f32
    b1 = hdr[0:1, 0:H]                              # (1, H)   shared bias
    b2 = hdr[1:2, :]                                # (1, 2H)  [bv1 | ba1]
    b3 = hdr[2:3, 0:H]                              # (1, H)   ba2 (cols >= A are 0)
    wv2_row = hdr[3:4, 0:H]                         # (1, H)   value output weight
    bv2 = hdr[4:5, 0:1]                             # (1, 1)   value output bias

    cdt = w_ref.dtype                               # MXU operand dtype (bf16 or f32)
    # tile-aligned static ref slices (S_pad is a multiple of the dtype sublane
    # tile) -> zero-cost views, no relayout copies
    w1 = w_ref[0:S, :]                              # (S_pad, H) shared trunk
    w3 = w_ref[S:S + H, :]                          # (H, H)     advantage head
    w2 = w2_ref[...]                                # (H, 2H)    fused [Wv1 | Wa1]

    x = x_ref[...].astype(cdt)                      # (Bt, S_pad)

    # shared trunk
    h = jnp.dot(x, w1, preferred_element_type=f32) + b1
    h = jnp.maximum(h, 0.0)                         # (Bt, H) f32

    # fused value/advantage hidden layer: one matmul instead of two
    h2 = jnp.dot(h.astype(cdt), w2, preferred_element_type=f32) + b2
    h2 = jnp.maximum(h2, 0.0)                       # (Bt, 2H); [:, :H]=v1, [:, H:]=a1
    hv = h2[:, 0:H]                                 # value-stream hidden
    ha = h2[:, H:]                                  # advantage-stream hidden

    # advantage head on the MXU: lane-dense (Bt, H); cols >= A are exactly 0
    # (zero weight cols, zero bias), so the unmasked lane-sum below is the
    # sum over the A real actions.
    a = jnp.dot(ha.astype(cdt), w3, preferred_element_type=f32) + b3        # (Bt, H)

    # value head on the VPU/XLU (no MXU pass, no (H,1)-shaped matmul)
    v = jnp.sum(hv * wv2_row, axis=-1, keepdims=True) + bv2                 # (Bt, 1)

    # dueling recombination: Q = V + A - mean(A)
    a_mean = jnp.sum(a, axis=-1, keepdims=True) * (1.0 / A)                 # (Bt, 1)

    # Full 128-lane store -> unmasked vst.  Cols >= A hold v - a_mean
    # (don't-care); every consumer must go through the wrapper's [:, :A].
    out_ref[...] = (a + v - a_mean).astype(out_ref.dtype)


def pack_params(params, *, weight_dtype=jnp.bfloat16):
    """Pack the 5 Linear layers into dense, dtype-tile-aligned buffers.

    Returns ((hdr_f32, wbuf, w2buf), meta):
      hdr_f32 (8, 2H)         f32           biases + value-output weight/bias
      wbuf    (S_pad + H, H)  weight_dtype  [W1 ; advantage head (cols<A)]
      w2buf   (H, 2H)         weight_dtype  fused hidden layer [Wv1 | Wa1]
    """
    ws, bs = params["ws"], params["bs"]             # (S, H), (1, H)
    wv1, bv1 = params["wv1"], params["bv1"]         # (H, H), (1, H)
    wv2, bv2 = params["wv2"], params["bv2"]         # (H, 1), (1, 1)
    wa1, ba1 = params["wa1"], params["ba1"]         # (H, H), (1, H)
    wa2, ba2 = params["wa2"], params["ba2"]         # (H, A), (1, A)

    S, H = ws.shape
    A = wa2.shape[1]
    assert H % 128 == 0, "hidden width must be lane-tile aligned"
    assert A <= H, "advantage head padded into H lanes needs A <= hidden width"

    # sublane tile of the weight dtype: f32 -> 8 rows, bf16 -> 16, int8/fp8 -> 32
    sub = 8 * (4 // jnp.dtype(weight_dtype).itemsize)
    assert H % sub == 0
    S_pad = ((S + sub - 1) // sub) * sub            # tile-aligned region boundary

    # f32 header (biases stay f32: matches the PyTorch reference; ~8 KB)
    hdr = jnp.zeros((8, 2 * H), jnp.float32)
    hdr = hdr.at[0, :H].set(bs[0])
    hdr = hdr.at[1, :H].set(bv1[0])
    hdr = hdr.at[1, H:].set(ba1[0])
    hdr = hdr.at[2, :A].set(ba2[0])
    hdr = hdr.at[3, :H].set(wv2[:, 0])
    hdr = hdr.at[4, 0].set(bv2[0, 0])

    # width-H weight buffer: shared trunk + advantage head (no zero half-lanes)
    wbuf = jnp.zeros((S_pad + H, H), jnp.float32)
    wbuf = wbuf.at[:S, :].set(ws)
    wbuf = wbuf.at[S_pad:, :A].set(wa2)

    # width-2H weight buffer: fused value|advantage hidden layer
    w2buf = jnp.concatenate([wv1, wa1], axis=1)     # (H, 2H)

    meta = dict(state_dim=S, padded_state_dim=S_pad, hidden=H, action_dim=A)
    # TODO(synk): on v7x, fp8 (e4m3) weight storage would quarter param DMA;
    # on v5e/v6e int8 is the native sub-bf16 MXU format.
    return (hdr, wbuf.astype(weight_dtype), w2buf.astype(weight_dtype)), meta


def dueling_dqn_forward(x, packed, meta, *, max_batch_tile=256):
    """x: (B, S) float32. packed/meta from pack_params(). Returns (Q, None)."""
    hdr, wbuf, w2buf = packed
    B = x.shape[0]
    S, S_pad = meta["state_dim"], meta["padded_state_dim"]
    H, A = meta["hidden"], meta["action_dim"]

    if S_pad != S:                                  # matching weight rows are zero
        x = jnp.pad(x, ((0, 0), (0, S_pad - S)))

    # batch tiling: sublane-aligned tile, params VMEM-resident across tiles
    B_min = ((B + 7) // 8) * 8
    Bt = B_min if B_min <= max_batch_tile else max_batch_tile
    B_full = ((B + Bt - 1) // Bt) * Bt
    if B_full != B:
        x = jnp.pad(x, ((0, B_full - B), (0, 0)))

    kernel = functools.partial(
        dueling_dqn_kernel, padded_state_dim=S_pad, hidden=H, action_dim=A)

    # Constant index_map on the param buffers -> DMA'd once, stay resident
    # across all batch tiles; batch axis marked "parallel" (megacore on v7x).
    # TODO(synk): for a long inference loop with static params, keep the param
    # buffers resident across calls via a cross-call VMEM+semaphore output
    # (P10) instead of re-DMAing them every step.
    q_padded = pl.pallas_call(
        kernel,
        out_shape=jax.ShapeDtypeStruct((B_full, H), jnp.float32),
        grid=(B_full // Bt,),
        in_specs=[
            pl.BlockSpec((Bt, S_pad), lambda i: (i, 0)),
            pl.BlockSpec(hdr.shape, lambda i: (0, 0)),
            pl.BlockSpec(wbuf.shape, lambda i: (0, 0)),
            pl.BlockSpec(w2buf.shape, lambda i: (0, 0)),
        ],
        out_specs=pl.BlockSpec((Bt, H), lambda i: (i, 0)),
        compiler_params=pltpu.CompilerParams(dimension_semantics=("parallel",)),
    )(x, hdr, wbuf, w2buf)

    # forward() returns (q_values, intent_logits=None)
    return q_padded[:B, :A], None


def init_params(key, state_dim, hidden, action_dim):
    """Deterministic synthetic parameters (PyTorch Linear shapes, stored transposed)."""
    ks = jax.random.split(key, 10)

    def linear(kw, kb, fan_in, fan_out):
        bound = 1.0 / (fan_in ** 0.5)   # torch.nn.Linear default init scale
        w = jax.random.uniform(kw, (fan_in, fan_out), jnp.float32, -bound, bound)
        b = jax.random.uniform(kb, (1, fan_out), jnp.float32, -bound, bound)
        return w, b

    ws, bs = linear(ks[0], ks[1], state_dim, hidden)
    wv1, bv1 = linear(ks[2], ks[3], hidden, hidden)
    wv2, bv2 = linear(ks[4], ks[5], hidden, 1)
    wa1, ba1 = linear(ks[6], ks[7], hidden, hidden)
    wa2, ba2 = linear(ks[8], ks[9], hidden, action_dim)
    return dict(ws=ws, bs=bs, wv1=wv1, bv1=bv1, wv2=wv2, bv2=bv2,
                wa1=wa1, ba1=ba1, wa2=wa2, ba2=ba2)


def reference_forward(x, p):
    h = jnp.maximum(x @ p["ws"] + p["bs"], 0.0)
    v = jnp.maximum(h @ p["wv1"] + p["bv1"], 0.0) @ p["wv2"] + p["bv2"]
    a = jnp.maximum(h @ p["wa1"] + p["ba1"], 0.0) @ p["wa2"] + p["ba2"]
    return v + a - jnp.mean(a, axis=-1, keepdims=True)


if __name__ == "__main__":
    # Small shapes consistent with the module: batch=8, state_dim=64,
    # hidden=128 (default layer sizes), action_dim=16.
    B, S, H, A = 8, 64, 128, 16

    key = jax.random.PRNGKey(0)
    k_x, k_p = jax.random.split(key)
    x = jax.random.normal(k_x, (B, S), jnp.float32)
    params = init_params(k_p, S, H, A)
    ref = reference_forward(x, params)

    # f32 weights: exact match with the reference
    packed_f32, meta32 = pack_params(params, weight_dtype=jnp.float32)
    q32, intents = dueling_dqn_forward(x, packed_f32, meta32)
    q32 = jax.block_until_ready(q32)
    assert q32.shape == (B, A)
    assert intents is None
    assert jnp.allclose(q32, ref, atol=1e-4, rtol=1e-4)

    # default path: bf16 weights (halved param DMA, native MXU path),
    # f32 biases/accumulation
    packed_bf16, meta16 = pack_params(params, weight_dtype=jnp.bfloat16)
    q16, _ = dueling_dqn_forward(x, packed_bf16, meta16)
    q16 = jax.block_until_ready(q16)
    assert q16.shape == (B, A)
    assert jnp.allclose(q16, ref, atol=5e-2, rtol=5e-2)

    # TODO(synk): ACTIONS_IN_STATE_SPACE branch (PackedSequence pad/mask path)
    # and weight_norm / dropout / q_value_clipping variants are not exercised
    # by the default config.
    print("KERNEL_OK")
</pallas_src>

<mosaic_0001>
module attributes {stable_mosaic.version = 11 : i64} {
  func.func @dueling_dqn_kernel(%arg0: i32, %arg1: memref<8x64xf32, #tpu.memory_space<vmem>>, %arg2: memref<8x256xf32, #tpu.memory_space<vmem>>, %arg3: memref<192x128xf32, #tpu.memory_space<vmem>>, %arg4: memref<128x256xf32, #tpu.memory_space<vmem>>, %arg5: memref<8x128xf32, #tpu.memory_space<vmem>>) attributes {dimension_semantics = [#tpu.dimension_semantics<parallel>], iteration_bounds = array<i64: 1>, scalar_prefetch = 0 : i64, scratch_operands = 0 : i64, tpu.core_type = #tpu.core_type<tc>, window_params = [{transform_indices = @transform_0, window_bounds = array<i64: 8, 64>}, {pipeline_mode = #tpu.pipeline_mode<synchronous>, transform_indices = @transform_1, window_bounds = array<i64: 8, 256>}, {pipeline_mode = #tpu.pipeline_mode<synchronous>, transform_indices = @transform_2, window_bounds = array<i64: 192, 128>}, {pipeline_mode = #tpu.pipeline_mode<synchronous>, transform_indices = @transform_3, window_bounds = array<i64: 128, 256>}, {transform_indices = @transform_4, window_bounds = array<i64: 8, 128>}]} {
    %c0 = arith.constant 0 : index
    %c0_0 = arith.constant 0 : index
    %0 = vector.load %arg2[%c0, %c0_0] : memref<8x256xf32, #tpu.memory_space<vmem>>, vector<8x256xf32>
    %1 = vector.extract_strided_slice %0 {offsets = [0, 0], sizes = [1, 128], strides = [1, 1]} : vector<8x256xf32> to vector<1x128xf32>
    %2 = vector.extract_strided_slice %0 {offsets = [1, 0], sizes = [1, 256], strides = [1, 1]} : vector<8x256xf32> to vector<1x256xf32>
    %3 = vector.extract_strided_slice %0 {offsets = [2, 0], sizes = [1, 128], strides = [1, 1]} : vector<8x256xf32> to vector<1x128xf32>
    %4 = vector.extract_strided_slice %0 {offsets = [3, 0], sizes = [1, 128], strides = [1, 1]} : vector<8x256xf32> to vector<1x128xf32>
    %5 = vector.extract_strided_slice %0 {offsets = [4, 0], sizes = [1, 1], strides = [1, 1]} : vector<8x256xf32> to vector<1x1xf32>
    %c0_1 = arith.constant 0 : index
    %c0_2 = arith.constant 0 : index
    %6 = vector.load %arg3[%c0_1, %c0_2] : memref<192x128xf32, #tpu.memory_space<vmem>>, vector<64x128xf32>
    %c64 = arith.constant 64 : index
    %c0_3 = arith.constant 0 : index
    %7 = vector.load %arg3[%c64, %c0_3] : memref<192x128xf32, #tpu.memory_space<vmem>>, vector<128x128xf32>
    %c0_4 = arith.constant 0 : index
    %c0_5 = arith.constant 0 : index
    %8 = vector.load %arg4[%c0_4, %c0_5] : memref<128x256xf32, #tpu.memory_space<vmem>>, vector<128x256xf32>
    %c0_6 = arith.constant 0 : index
    %c0_7 = arith.constant 0 : index
    %9 = vector.load %arg1[%c0_6, %c0_7] : memref<8x64xf32, #tpu.memory_space<vmem>>, vector<8x64xf32>
    %cst = arith.constant dense<0.000000e+00> : vector<8x128xf32>
    %10 = tpu.matmul %9, %6, %cst {dimension_numbers = #tpu.dot_dimension_numbers<[1], [0], [0], [1], [0, 0, 1, 1], [], []>} : vector<8x64xf32>, vector<64x128xf32>, vector<8x128xf32> -> vector<8x128xf32>
    %11 = vector.broadcast %1 : vector<1x128xf32> to vector<8x128xf32>
    %12 = arith.addf %10, %11 : vector<8x128xf32>
    %cst_8 = arith.constant 0.000000e+00 : f32
    %13 = vector.broadcast %cst_8 : f32 to vector<8x128xf32>
    %14 = arith.maximumf %12, %13 : vector<8x128xf32>
    %cst_9 = arith.constant dense<0.000000e+00> : vector<8x256xf32>
    %15 = tpu.matmul %14, %8, %cst_9 {dimension_numbers = #tpu.dot_dimension_numbers<[1], [0], [0], [1], [0, 0, 1, 1], [], []>} : vector<8x128xf32>, vector<128x256xf32>, vector<8x256xf32> -> vector<8x256xf32>
    %16 = vector.broadcast %2 : vector<1x256xf32> to vector<8x256xf32>
    %17 = arith.addf %15, %16 : vector<8x256xf32>
    %cst_10 = arith.constant 0.000000e+00 : f32
    %18 = vector.broadcast %cst_10 : f32 to vector<8x256xf32>
    %19 = arith.maximumf %17, %18 : vector<8x256xf32>
    %20 = vector.extract_strided_slice %19 {offsets = [0, 0], sizes = [8, 128], strides = [1, 1]} : vector<8x256xf32> to vector<8x128xf32>
    %21 = vector.extract_strided_slice %19 {offsets = [0, 128], sizes = [8, 128], strides = [1, 1]} : vector<8x256xf32> to vector<8x128xf32>
    %cst_11 = arith.constant dense<0.000000e+00> : vector<8x128xf32>
    %22 = tpu.matmul %21, %7, %cst_11 {dimension_numbers = #tpu.dot_dimension_numbers<[1], [0], [0], [1], [0, 0, 1, 1], [], []>} : vector<8x128xf32>, vector<128x128xf32>, vector<8x128xf32> -> vector<8x128xf32>
    %23 = vector.broadcast %3 : vector<1x128xf32> to vector<8x128xf32>
    %24 = arith.addf %22, %23 : vector<8x128xf32>
    %25 = vector.broadcast %4 : vector<1x128xf32> to vector<8x128xf32>
    %26 = arith.mulf %20, %25 : vector<8x128xf32>
    %cst_12 = arith.constant dense<0.000000e+00> : vector<8xf32>
    %27 = vector.multi_reduction <add>, %26, %cst_12 [1] : vector<8x128xf32> to vector<8xf32>
    %28 = vector.shape_cast %27 : vector<8xf32> to vector<8x1xf32>
    %29 = vector.broadcast %5 : vector<1x1xf32> to vector<8x1xf32>
    %30 = arith.addf %28, %29 : vector<8x1xf32>
    %cst_13 = arith.constant dense<0.000000e+00> : vector<8xf32>
    %31 = vector.multi_reduction <add>, %24, %cst_13 [1] : vector<8x128xf32> to vector<8xf32>
    %32 = vector.shape_cast %31 : vector<8xf32> to vector<8x1xf32>
    %cst_14 = arith.constant 6.250000e-02 : f32
    %33 = vector.broadcast %cst_14 : f32 to vector<8x1xf32>
    %34 = arith.mulf %32, %33 : vector<8x1xf32>
    %35 = vector.broadcast %30 : vector<8x1xf32> to vector<8x128xf32>
    %36 = arith.addf %24, %35 : vector<8x128xf32>
    %37 = vector.broadcast %34 : vector<8x1xf32> to vector<8x128xf32>
    %38 = arith.subf %36, %37 : vector<8x128xf32>
    %c0_15 = arith.constant 0 : index
    %c0_16 = arith.constant 0 : index
    %39 = vector.load %arg5[%c0_15, %c0_16] : memref<8x128xf32, #tpu.memory_space<vmem>>, vector<8x128xf32>
    tpu.vector_store %arg5[%c0_15, %c0_16], %38 {strides = array<i32>} : memref<8x128xf32, #tpu.memory_space<vmem>>, vector<8x128xf32>,
    return
  }
  func.func @transform_0(%arg0: i32) -> (i32, i32) {
    %c0_i32 = arith.constant 0 : i32
    %c0_i32_0 = arith.constant 0 : i32
    return %arg0, %c0_i32 : i32, i32
  }
  func.func @transform_1(%arg0: i32) -> (i32, i32) {
    %c0_i32 = arith.constant 0 : i32
    %c0_i32_0 = arith.constant 0 : i32
    %c0_i32_1 = arith.constant 0 : i32
    return %c0_i32, %c0_i32_0 : i32, i32
  }
  func.func @transform_2(%arg0: i32) -> (i32, i32) {
    %c0_i32 = arith.constant 0 : i32
    %c0_i32_0 = arith.constant 0 : i32
    %c0_i32_1 = arith.constant 0 : i32
    return %c0_i32, %c0_i32_0 : i32, i32
  }
  func.func @transform_3(%arg0: i32) -> (i32, i32) {
    %c0_i32 = arith.constant 0 : i32
    %c0_i32_0 = arith.constant 0 : i32
    %c0_i32_1 = arith.constant 0 : i32
    return %c0_i32, %c0_i32_0 : i32, i32
  }
  func.func @transform_4(%arg0: i32) -> (i32, i32) {
    %c0_i32 = arith.constant 0 : i32
    %c0_i32_0 = arith.constant 0 : i32
    return %arg0, %c0_i32 : i32, i32
  }
}

</mosaic_0001>

<llo_original>
// kernel: tpu_custom_call.1
$region0: #{tpu_custom_call.1}
  #allocation0 [shape = 'u32[]', space=smem, size = 0x4, offset = 0x4, fixed_abs, tag = 'smem constant byte address 0x4 - core index']
  #allocation1 [shape = 'u32[72,128]{1,0:T(1,128)}', space=vmem, size = 0x9000, scoped, tag = 'internal scratch']
  %s0 = inlined_call_operand.hbm [shape: f32[8,64], index: 0, kind: input, shape index: {}]
  %s1 = inlined_call_operand.hbm [shape: f32[8,256], index: 1, kind: input, shape index: {}]
  %s2 = inlined_call_operand.hbm [shape: f32[192,128], index: 2, kind: input, shape index: {}]
  %s3 = inlined_call_operand.hbm [shape: f32[128,256], index: 3, kind: input, shape index: {}]
  %s4 = inlined_call_operand.hbm [shape: f32[8,128], index: 4, kind: output, shape index: {}]
  %s5 = sld [smem:[#allocation0]]
  $region42: #{tpu_custom_call.1} parent=0
    _
  %s7 = ssub.s32 1, %s5
  %s8 = scalar_select 0, %s7, %s5
  $region1: #{tpu_custom_call.1} parent=0
    #allocation2 [shape = 'u8[4096]{0}', space=vmem, size = 0x1000, scoped, tag = 'input window, operand 0, single buffered']
    #allocation3 [shape = 's32[1]{0}', space=sflag, size = 0x4, scoped, tag = 'scoped memory for tpu_custom_call.1']
    #allocation4 [shape = 's32[1]{0}', space=sflag, size = 0x4, scoped, tag = 'scoped memory for tpu_custom_call.1']
    #allocation5 [shape = 'u8[8192]{0}', space=vmem, size = 0x2000, scoped, tag = 'input window, operand 1, single buffered']
    #allocation6 [shape = 's32[1]{0}', space=sflag, size = 0x4, scoped, tag = 'scoped memory for tpu_custom_call.1']
    #allocation7 [shape = 'u8[98304]{0}', space=vmem, size = 0x18000, scoped, tag = 'input window, operand 2, single buffered']
    #allocation8 [shape = 'u8[131072]{0}', space=vmem, size = 0x20000, scoped, tag = 'input window, operand 3, single buffered']
    #allocation9 [shape = 's32[1]{0}', space=sflag, size = 0x4, scoped, tag = 'scoped memory for tpu_custom_call.1']
    #allocation10 [shape = 'u8[4096]{0}', space=vmem, size = 0x1000, scoped, tag = 'output window, operand 0, single buffered']
    %9 = vsyncpa [#allocation3], 0
    %10 = vsyncpa [#allocation6], 0
    %11 = vsyncpa [#allocation9], 0
    %12 = vsyncpa [#allocation4], 0
    // Predicated region
    $region2: #{tpu_custom_call.1} parent=1 // pred_check
      _
    $region3: #{tpu_custom_call.1} parent=1 // pred_check_branch
      %14 = sbr.rel (0) target = $region5
    $region4: #{tpu_custom_call.1} parent=1 // pred_region
      %16 = vsyncadd [#allocation3], 0
      %s18 = sshll.u32 %s0, 4
      %s19 = int_to_ptr.hbm [resolvable:$true] %s18
      %s20 = sshll.u32 [#allocation2], 4
      %s21 = int_to_ptr.vmem [resolvable:$true] %s20
      %23 = dma.hbm_to_vmem [thread:$0]  %s19, 128, %s21, [#allocation3]
    $region5: #{tpu_custom_call.1} parent=1 // pred_fallthru
      _
    // Predicated region
    $region6: #{tpu_custom_call.1} parent=1 // pred_check
      _
    $region7: #{tpu_custom_call.1} parent=1 // pred_check_branch
      %25 = sbr.rel (0) target = $region9
    $region8: #{tpu_custom_call.1} parent=1 // pred_region
      %27 = vsyncadd [#allocation6], 0
      %s29 = sshll.u32 %s1, 4
      %s30 = int_to_ptr.hbm [resolvable:$true] %s29
      %s31 = sshll.u32 [#allocation5], 4
      %s32 = int_to_ptr.vmem [resolvable:$true] %s31
      %34 = dma.hbm_to_vmem [thread:$0]  %s30, 256, %s32, [#allocation6]
    $region9: #{tpu_custom_call.1} parent=1 // pred_fallthru
      _
    // Predicated region
    $region10: #{tpu_custom_call.1} parent=1 // pred_check
      _
    $region11: #{tpu_custom_call.1} parent=1 // pred_check_branch
      %36 = sbr.rel (0) target = $region13
    $region12: #{tpu_custom_call.1} parent=1 // pred_region
      %38 = vsyncadd [#allocation6], 0
      %s39 = sshll.u32 %s2, 4
      %s40 = int_to_ptr.hbm [resolvable:$true] %s39
      %s41 = sshll.u32 [#allocation7], 4
      %s42 = int_to_ptr.vmem [resolvable:$true] %s41
      %47 = dma.hbm_to_vmem [thread:$0]  %s40, 3072, %s42, [#allocation6], 128, 128, 8
    $region13: #{tpu_custom_call.1} parent=1 // pred_fallthru
      _
    // Predicated region
    $region14: #{tpu_custom_call.1} parent=1 // pred_check
      _
    $region15: #{tpu_custom_call.1} parent=1 // pred_check_branch
      %49 = sbr.rel (0) target = $region17
    $region16: #{tpu_custom_call.1} parent=1 // pred_region
      %51 = vsyncadd [#allocation9], 0
      %s52 = sshll.u32 %s3, 4
      %s53 = int_to_ptr.hbm [resolvable:$true] %s52
      %s54 = sshll.u32 [#allocation8], 4
      %s55 = int_to_ptr.vmem [resolvable:$true] %s54
      %60 = dma.hbm_to_vmem [thread:$0]  %s53, 4096, %s55, [#allocation9], 256, 256, 16
    $region17: #{tpu_custom_call.1} parent=1 // pred_fallthru
      _
    // Predicated region
    $region18: #{tpu_custom_call.1} parent=1 // pred_check
      _
    $region19: #{tpu_custom_call.1} parent=1 // pred_check_branch
      %62 = sbr.rel (0) target = $region21
    $region20: #{tpu_custom_call.1} parent=1 // pred_region
      %64 = dma.done [#allocation3], 128
    $region21: #{tpu_custom_call.1} parent=1 // pred_fallthru
      _
    // Predicated region
    $region22: #{tpu_custom_call.1} parent=1 // pred_check
      _
    $region23: #{tpu_custom_call.1} parent=1 // pred_check_branch
      %66 = sbr.rel (0) target = $region25
    $region24: #{tpu_custom_call.1} parent=1 // pred_region
      %68 = dma.done [#allocation6], 256
    $region25: #{tpu_custom_call.1} parent=1 // pred_fallthru
      _
    // Predicated region
    $region26: #{tpu_custom_call.1} parent=1 // pred_check
      _
    $region27: #{tpu_custom_call.1} parent=1 // pred_check_branch
      %70 = sbr.rel (0) target = $region29
    $region28: #{tpu_custom_call.1} parent=1 // pred_region
      %72 = dma.done [#allocation6], 3072
    $region29: #{tpu_custom_call.1} parent=1 // pred_fallthru
      _
    // Predicated region
    $region30: #{tpu_custom_call.1} parent=1 // pred_check
      _
    $region31: #{tpu_custom_call.1} parent=1 // pred_check_branch
      %74 = sbr.rel (0) target = $region33
    $region32: #{tpu_custom_call.1} parent=1 // pred_region
      %76 = dma.done [#allocation9], 4096
    $region33: #{tpu_custom_call.1} parent=1 // pred_fallthru
      _
    %v77 = vld [vmem:[#allocation5] sm:$0xff]
    %v78 = vld [vmem:[#allocation5 + $0x8] sm:$0xff]
    %v79 = vld [vmem:[#allocation7] sm:$0xff]
    %v80 = vld [vmem:[#allocation7 + $0x8] sm:$0xff]
    %v81 = vld [vmem:[#allocation7 + $0x10] sm:$0xff]
    %v82 = vld [vmem:[#allocation7 + $0x18] sm:$0xff]
    %v83 = vld [vmem:[#allocation7 + $0x20] sm:$0xff]
    %v84 = vld [vmem:[#allocation7 + $0x28] sm:$0xff]
    %v85 = vld [vmem:[#allocation7 + $0x30] sm:$0xff]
    %v86 = vld [vmem:[#allocation7 + $0x38] sm:$0xff]
    %v87 = vld [vmem:[#allocation7 + $0x40] sm:$0xff]
    %v88 = vld [vmem:[#allocation7 + $0x48] sm:$0xff]
    %v89 = vld [vmem:[#allocation7 + $0x50] sm:$0xff]
    %v90 = vld [vmem:[#allocation7 + $0x58] sm:$0xff]
    %v91 = vld [vmem:[#allocation7 + $0x60] sm:$0xff]
    %v92 = vld [vmem:[#allocation7 + $0x68] sm:$0xff]
    %v93 = vld [vmem:[#allocation7 + $0x70] sm:$0xff]
    %v94 = vld [vmem:[#allocation7 + $0x78] sm:$0xff]
    %v95 = vld [vmem:[#allocation7 + $0x80] sm:$0xff]
    %v96 = vld [vmem:[#allocation7 + $0x88] sm:$0xff]
    %v97 = vld [vmem:[#allocation7 + $0x90] sm:$0xff]
    %v98 = vld [vmem:[#allocation7 + $0x98] sm:$0xff]
    %v99 = vld [vmem:[#allocation7 + $0xa0] sm:$0xff]
    %v100 = vld [vmem:[#allocation7 + $0xa8] sm:$0xff]
    %v101 = vld [vmem:[#allocation7 + $0xb0] sm:$0xff]
    %v102 = vld [vmem:[#allocation7 + $0xb8] sm:$0xff]
    %v103 = vld [vmem:[#allocation8] sm:$0xff]
    %v104 = vld [vmem:[#allocation8 + $0x8] sm:$0xff]
    %v105 = vld [vmem:[#allocation8 + $0x10] sm:$0xff]
    %v106 = vld [vmem:[#allocation8 + $0x18] sm:$0xff]
    %v107 = vld [vmem:[#allocation8 + $0x20] sm:$0xff]
    %v108 = vld [vmem:[#allocation8 + $0x28] sm:$0xff]
    %v109 = vld [vmem:[#allocation8 + $0x30] sm:$0xff]
    %v110 = vld [vmem:[#allocation8 + $0x38] sm:$0xff]
    %v111 = vld [vmem:[#allocation8 + $0x40] sm:$0xff]
    %v112 = vld [vmem:[#allocation8 + $0x48] sm:$0xff]
    %v113 = vld [vmem:[#allocation8 + $0x50] sm:$0xff]
    %v114 = vld [vmem:[#allocation8 + $0x58] sm:$0xff]
    %v115 = vld [vmem:[#allocation8 + $0x60] sm:$0xff]
    %v116 = vld [vmem:[#allocation8 + $0x68] sm:$0xff]
    %v117 = vld [vmem:[#allocation8 + $0x70] sm:$0xff]
    %v118 = vld [vmem:[#allocation8 + $0x78] sm:$0xff]
    %v119 = vld [vmem:[#allocation8 + $0x80] sm:$0xff]
    %v120 = vld [vmem:[#allocation8 + $0x88] sm:$0xff]
    %v121 = vld [vmem:[#allocation8 + $0x90] sm:$0xff]
    %v122 = vld [vmem:[#allocation8 + $0x98] sm:$0xff]
    %v123 = vld [vmem:[#allocation8 + $0xa0] sm:$0xff]
    %v124 = vld [vmem:[#allocation8 + $0xa8] sm:$0xff]
    %v125 = vld [vmem:[#allocation8 + $0xb0] sm:$0xff]
    %v126 = vld [vmem:[#allocation8 + $0xb8] sm:$0xff]
    %v127 = vld [vmem:[#allocation8 + $0xc0] sm:$0xff]
    %v128 = vld [vmem:[#allocation8 + $0xc8] sm:$0xff]
    %v129 = vld [vmem:[#allocation8 + $0xd0] sm:$0xff]
    %v130 = vld [vmem:[#allocation8 + $0xd8] sm:$0xff]
    %v131 = vld [vmem:[#allocation8 + $0xe0] sm:$0xff]
    %v132 = vld [vmem:[#allocation8 + $0xe8] sm:$0xff]
    %v133 = vld [vmem:[#allocation8 + $0xf0] sm:$0xff]
    %v134 = vld [vmem:[#allocation8 + $0xf8] sm:$0xff]
    %v135 = vld [vmem:[#allocation2] sm:$0xff]
    %v136 = vperm.slane %v77, 0
    %vm137 = vcmask 523264
    %v139 = vsel %vm137, %v135, 0
    %141 = vmatpush.msra.mxu0 0.0
    %142 = vmatpush.msra.mxu0 0.0
    %143 = vmatpush.msra.mxu0 0.0
    %144 = vmatpush.msra.mxu0 0.0
    %145 = vmatpush.msra.mxu0 0.0
    %146 = vmatpush.msra.mxu0 0.0
    %147 = vmatpush.msra.mxu0 0.0
    %148 = vmatpush.msra.mxu0 0.0
    %149 = vmatpush.msra.mxu0 %v86
    %150 = vmatpush.msra.mxu0 %v85
    %151 = vmatpush.msra.mxu0 %v84
    %152 = vmatpush.msra.mxu0 %v83
    %153 = vmatpush.msra.mxu0 %v82
    %154 = vmatpush.msra.mxu0 %v81
    %155 = vmatpush.msra.mxu0 %v80
    %156 = vmatpush.msra.mxu0 %v79
    %157 = vmatmul.f32.gmra.mxu0 %v139
    %v158 = vpop.f32.mrf.mxu0
    %v159 = vadd.f32 %v136, %v158
    %160 = vdwg.mxu0
    %v161 = vmax.f32 %v159, 0.0
    %v162 = vperm.slane %v77, 1
    %v163 = vperm.slane %v78, 1
    %164 = vmatpush.msra.mxu0 %v133
    %165 = vmatpush.msra.mxu0 %v131
    %166 = vmatpush.msra.mxu0 %v129
    %167 = vmatpush.msra.mxu0 %v127
    %168 = vmatpush.msra.mxu0 %v125
    %169 = vmatpush.msra.mxu0 %v123
    %170 = vmatpush.msra.mxu0 %v121
    %171 = vmatpush.msra.mxu0 %v119
    %172 = vmatpush.msra.mxu0 %v117
    %173 = vmatpush.msra.mxu0 %v115
    %174 = vmatpush.msra.mxu0 %v113
    %175 = vmatpush.msra.mxu0 %v111
    %176 = vmatpush.msra.mxu0 %v109
    %177 = vmatpush.msra.mxu0 %v107
    %178 = vmatpush.msra.mxu0 %v105
    %179 = vmatpush.msra.mxu0 %v103
    %180 = vmatmul.f32.gmra.mxu0 %v161
    %v181 = vpop.f32.mrf.mxu0
    %v182 = vadd.f32 %v162, %v181
    %183 = vdwg.mxu0
    %184 = vmatpush.msra.mxu0 %v134
    %185 = vmatpush.msra.mxu0 %v132
    %186 = vmatpush.msra.mxu0 %v130
    %187 = vmatpush.msra.mxu0 %v128
    %188 = vmatpush.msra.mxu0 %v126
    %189 = vmatpush.msra.mxu0 %v124
    %190 = vmatpush.msra.mxu0 %v122
    %191 = vmatpush.msra.mxu0 %v120
    %192 = vmatpush.msra.mxu0 %v118
    %193 = vmatpush.msra.mxu0 %v116
    %194 = vmatpush.msra.mxu0 %v114
    %195 = vmatpush.msra.mxu0 %v112
    %196 = vmatpush.msra.mxu0 %v110
    %197 = vmatpush.msra.mxu0 %v108
    %198 = vmatpush.msra.mxu0 %v106
    %199 = vmatpush.msra.mxu0 %v104
    %200 = vmatmul.f32.gmra.mxu0 %v161
    %v201 = vpop.f32.mrf.mxu0
    %v202 = vadd.f32 %v163, %v201
    %203 = vdwg.mxu0
    %v204 = vmax.f32 %v182, 0.0
    %v205 = vmax.f32 %v202, 0.0
    %v206 = vperm.slane %v77, 2
    %207 = vmatpush.msra.mxu0 %v102
    %208 = vmatpush.msra.mxu0 %v101
    %209 = vmatpush.msra.mxu0 %v100
    %210 = vmatpush.msra.mxu0 %v99
    %211 = vmatpush.msra.mxu0 %v98
    %212 = vmatpush.msra.mxu0 %v97
    %213 = vmatpush.msra.mxu0 %v96
    %214 = vmatpush.msra.mxu0 %v95
    %215 = vmatpush.msra.mxu0 %v94
    %216 = vmatpush.msra.mxu0 %v93
    %217 = vmatpush.msra.mxu0 %v92
    %218 = vmatpush.msra.mxu0 %v91
    %219 = vmatpush.msra.mxu0 %v90
    %220 = vmatpush.msra.mxu0 %v89
    %221 = vmatpush.msra.mxu0 %v88
    %222 = vmatpush.msra.mxu0 %v87
    %223 = vmatmul.f32.gmra.mxu0 %v205
    %v224 = vpop.f32.mrf.mxu0
    %v225 = vadd.f32 %v206, %v224
    %226 = vdwg.mxu0
    %v227 = vperm.slane %v77, 3
    %v228 = vmul.f32 %v204, %v227
    %229 = vadd.xlane.f32.xlu0 %v228
    %v230 = vpop.xlane.xlu0 %229
    %v231 = vperm.slane %v77, 4
    %v232 = vadd.f32 %v230, %v231
    %233 = vadd.xlane.f32.xlu0 %v225
    %v234 = vpop.xlane.xlu0 %233
    %v235 = vmul.f32 %v234, 0.0625
    %237 = vset.pattern.permute.xlu0 0
    %238 = vperm.xlu0 %237, %v232
    %v239 = vpop.permute.xlu0 %238
    %v241 = vadd.f32 %v225, %v239
    %v242 = vsub.f32 %v241, %v235
    %243 = vst [vmem:[#allocation10] sm:$0xff] %v242
    // Predicated region
    $region34: #{tpu_custom_call.1} parent=1 // pred_check
      _
    $region35: #{tpu_custom_call.1} parent=1 // pred_check_branch
      %245 = sbr.rel (0) target = $region37
    $region36: #{tpu_custom_call.1} parent=1 // pred_region
      %247 = vsyncadd [#allocation4], 0
      %s249 = sshll.u32 [#allocation10], 4
      %s250 = int_to_ptr.vmem [resolvable:$true] %s249
      %s251 = sshll.u32 %s4, 4
      %s252 = int_to_ptr.hbm [resolvable:$true] %s251
      %254 = dma.vmem_to_hbm [thread:$0]  %s250, 128, %s252, [#allocation4]
    $region37: #{tpu_custom_call.1} parent=1 // pred_fallthru
      _
    // Predicated region
    $region38: #{tpu_custom_call.1} parent=1 // pred_check
      _
    $region39: #{tpu_custom_call.1} parent=1 // pred_check_branch
      %256 = sbr.rel (0) target = $region41
    $region40: #{tpu_custom_call.1} parent=1 // pred_region
      %258 = dma.done [#allocation4], 128
    $region41: #{tpu_custom_call.1} parent=1 // pred_fallthru
      _
    %259 = vsyncpa [#allocation3], 1
    %260 = vsyncpa [#allocation6], 1
    %261 = vsyncpa [#allocation9], 1
    %262 = vsyncpa [#allocation4], 1

</llo_original>
